<compile_context>
chip_gen: v7x
topology: tpu7x:2x2x1
jax: 0.10.0
libtpu: 0.0.40
codegen_flags: <defaults>
</compile_context>

<pallas_src>
import jax
import jax.numpy as jnp
import numpy as np
from jax.experimental import pallas as pl
from jax.experimental.pallas import tpu as pltpu

LEAKY_SLOPE = 0.2
IN_PAD = 8       # padded contraction width (covers layer input widths 2, 8, 5)
OUT_PAD = 8      # padded per-layer output width (covers output widths 8, 5, 3)
LANE = 128       # batch padded to a multiple of 128 lanes
NEG_CAP = -3.0e38    # finite clamp for the masked max (empty-batch guard)


def _leaky_relu(x):
    # max(x, 0.2*x) == LeakyReLU(0.2) exactly; 2 VALU ops instead of 3.
    return jnp.maximum(x, LEAKY_SLOPE * x)


def mlp_softmax_kernel(nvalid_ref, xt_ref, w_ref, b_ref, o_ref):
    """Whole (padded) problem lives in VMEM; single invocation, no grid.

    Transposed layout: features on sublanes, batch on lanes.
      nvalid_ref: (1,)       int32 SMEM -- number of valid batch columns
      xt_ref:     (8, BL)    f32 VMEM   -- x^T, features zero-padded 2 -> 8
      w_ref:      (3, 8, 8)  f32 VMEM   -- stacked (out, in) weights, zero-padded
      b_ref:      (3, 8, 1)  f32 VMEM   -- stacked biases (lane-broadcast)
      o_ref:      (8, BL)    f32 VMEM   -- softmax over the batch (lane) axis
    """
    nb = nvalid_ref[0]

    h = xt_ref[...]                                              # (8, BL)
    for layer in range(3):                                       # static unroll
        h = jnp.dot(w_ref[layer], h,
                    preferred_element_type=jnp.float32) + b_ref[layer]
        h = _leaky_relu(h)

    # softmax over dim=0 of the original (B, 3) layout == over the lane (batch)
    # axis here.  Mask padded batch columns with -inf so they contribute 0.
    col_ids = jax.lax.broadcasted_iota(jnp.int32, (1, h.shape[1]), 1)
    hm = jnp.where(col_ids < nb, h, -jnp.inf)                    # (8, BL)
    m = jnp.maximum(jnp.max(hm, axis=1, keepdims=True), NEG_CAP)  # (8,1) XLU
    e = jnp.exp(hm - m)                                          # EUP; 0 on pad
    s = jnp.maximum(jnp.sum(e, axis=1, keepdims=True), 1e-30)    # NaN guard
    o_ref[...] = e * pl.reciprocal(s, approx=False)
    # Rows 3..7 (padded output features) hold a uniform 1/nb; they are sliced
    # away by the jitted wrapper and never observed by callers.


def prepare_params(params):
    """Pad + stack parameters ONCE (hoisted out of the per-call path).

    params: list of (W(in, out), b(out,)) for the 3 layers.
    Returns (w_stack (3, 8, 8) in torch-native (out, in) order,
             b_stack (3, 8, 1)), both float32.
    """
    ws, bs = [], []
    for w, b in params:
        wt = jnp.asarray(w, jnp.float32).T                       # (out, in)
        ws.append(jnp.pad(wt, ((0, OUT_PAD - wt.shape[0]),
                               (0, IN_PAD - wt.shape[1]))))
        bs.append(jnp.pad(jnp.asarray(b, jnp.float32),
                          (0, OUT_PAD - b.shape[0]))[:, None])
    return jnp.stack(ws), jnp.stack(bs)


@jax.jit
def neuralnet_forward(x, w_stack, b_stack):
    """x: (B, 2) float32.  Returns (B, 3) softmax(dim=0) output.

    Pad, kernel, slice and transpose are all fused into one executable; B is a
    trace-time constant so nvalid is constant-folded into the call.
    """
    B, F = x.shape
    BL = ((B + LANE - 1) // LANE) * LANE                         # lane multiple

    x_t = jnp.pad(x.astype(jnp.float32).T, ((0, IN_PAD - F), (0, BL - B)))
    nvalid = jnp.full((1,), B, jnp.int32)

    flops = 2 * OUT_PAD * IN_PAD * BL * 3 + 8 * OUT_PAD * BL     # dots + eltwise
    bytes_accessed = 4 * (x_t.size + w_stack.size + b_stack.size
                          + OUT_PAD * BL) + 4

    vmem = pl.BlockSpec(memory_space=pltpu.MemorySpace.VMEM)
    smem = pl.BlockSpec(memory_space=pltpu.MemorySpace.SMEM)

    out_t = pl.pallas_call(
        mlp_softmax_kernel,
        out_shape=jax.ShapeDtypeStruct((OUT_PAD, BL), jnp.float32),
        in_specs=[smem, vmem, vmem, vmem],
        out_specs=vmem,
        cost_estimate=pl.CostEstimate(
            flops=flops,
            transcendentals=OUT_PAD * BL,
            bytes_accessed=bytes_accessed,
        ),
    )(nvalid, x_t, w_stack, b_stack)

    return out_t[:3, :B].T                                       # (B, 3)


def make_params(key, hidden_layer_widths=(8, 5)):
    """Deterministic parameter init matching the torch module's layer shapes.
    Weights are stored as (in, out), i.e. torch weight (out, in) transposed."""
    widths = [2] + list(hidden_layer_widths) + [3]
    params = []
    for i in range(len(widths) - 1):
        key, kw, kb = jax.random.split(key, 3)
        w = 0.5 * jax.random.normal(kw, (widths[i], widths[i + 1]), jnp.float32)
        b = 0.1 * jax.random.normal(kb, (widths[i + 1],), jnp.float32)
        params.append((w, b))
    return params


def reference_forward(x, params):
    """Pure-JAX reference implementing the torch forward exactly."""
    h = x
    for (w, b) in params:
        h = _leaky_relu(h @ w + b)
    # torch.nn.functional.softmax(dataState, dim=0)
    m = jnp.max(h, axis=0, keepdims=True)
    e = jnp.exp(h - m)
    return e / jnp.sum(e, axis=0, keepdims=True)


if __name__ == "__main__":
    key = jax.random.PRNGKey(0)
    key, kx = jax.random.split(key)

    # Small batch of rescaled-observation-like inputs: (batch=4, features=2).
    B = 4
    x = jax.random.uniform(kx, (B, 2), jnp.float32)   # rescaled obs live in [0, 1]

    params = make_params(key)
    w_stack, b_stack = prepare_params(params)         # one-time padding/stacking

    out = neuralnet_forward(x, w_stack, b_stack)
    out = jax.block_until_ready(out)

    ref = reference_forward(x, params)
    np.testing.assert_allclose(np.asarray(out), np.asarray(ref),
                               rtol=1e-5, atol=1e-6)

    print("KERNEL_OK")
</pallas_src>

<mosaic_0001>
module attributes {stable_mosaic.version = 11 : i64} {
  func.func @mlp_softmax_kernel(%arg0: memref<1xi32, #tpu.memory_space<smem>>, %arg1: memref<8x128xf32, #tpu.memory_space<vmem>>, %arg2: memref<3x8x8xf32, #tpu.memory_space<vmem>>, %arg3: memref<3x8x1xf32, #tpu.memory_space<vmem>>, %arg4: memref<8x128xf32, #tpu.memory_space<vmem>>) attributes {dimension_semantics = [], scalar_prefetch = 0 : i64, scratch_operands = 0 : i64, tpu.core_type = #tpu.core_type<tc>} {
    %c0 = arith.constant 0 : index
    %0 = memref.load %arg0[%c0] : memref<1xi32, #tpu.memory_space<smem>>
    %c0_0 = arith.constant 0 : index
    %c0_1 = arith.constant 0 : index
    %1 = vector.load %arg1[%c0_0, %c0_1] : memref<8x128xf32, #tpu.memory_space<vmem>>, vector<8x128xf32>
    %c0_2 = arith.constant 0 : index
    %c0_3 = arith.constant 0 : index
    %c0_4 = arith.constant 0 : index
    %2 = vector.load %arg2[%c0_2, %c0_3, %c0_4] : memref<3x8x8xf32, #tpu.memory_space<vmem>>, vector<1x8x8xf32>
    %3 = vector.shape_cast %2 : vector<1x8x8xf32> to vector<8x8xf32>
    %cst = arith.constant dense<0.000000e+00> : vector<8x128xf32>
    %4 = tpu.matmul %3, %1, %cst {dimension_numbers = #tpu.dot_dimension_numbers<[1], [0], [0], [1], [0, 0, 1, 1], [], []>} : vector<8x8xf32>, vector<8x128xf32>, vector<8x128xf32> -> vector<8x128xf32>
    %c0_5 = arith.constant 0 : index
    %c0_6 = arith.constant 0 : index
    %c0_7 = arith.constant 0 : index
    %5 = vector.load %arg3[%c0_5, %c0_6, %c0_7] : memref<3x8x1xf32, #tpu.memory_space<vmem>>, vector<1x8x1xf32>
    %6 = vector.shape_cast %5 : vector<1x8x1xf32> to vector<8x1xf32>
    %7 = vector.broadcast %6 : vector<8x1xf32> to vector<8x128xf32>
    %8 = arith.addf %4, %7 : vector<8x128xf32>
    %cst_8 = arith.constant 2.000000e-01 : f32
    %9 = vector.broadcast %cst_8 : f32 to vector<8x128xf32>
    %10 = arith.mulf %9, %8 : vector<8x128xf32>
    %11 = arith.maximumf %8, %10 : vector<8x128xf32>
    %c1 = arith.constant 1 : index
    %c0_9 = arith.constant 0 : index
    %c0_10 = arith.constant 0 : index
    %12 = vector.load %arg2[%c1, %c0_9, %c0_10] : memref<3x8x8xf32, #tpu.memory_space<vmem>>, vector<1x8x8xf32>
    %13 = vector.shape_cast %12 : vector<1x8x8xf32> to vector<8x8xf32>
    %cst_11 = arith.constant dense<0.000000e+00> : vector<8x128xf32>
    %14 = tpu.matmul %13, %11, %cst_11 {dimension_numbers = #tpu.dot_dimension_numbers<[1], [0], [0], [1], [0, 0, 1, 1], [], []>} : vector<8x8xf32>, vector<8x128xf32>, vector<8x128xf32> -> vector<8x128xf32>
    %c1_12 = arith.constant 1 : index
    %c0_13 = arith.constant 0 : index
    %c0_14 = arith.constant 0 : index
    %15 = vector.load %arg3[%c1_12, %c0_13, %c0_14] : memref<3x8x1xf32, #tpu.memory_space<vmem>>, vector<1x8x1xf32>
    %16 = vector.shape_cast %15 : vector<1x8x1xf32> to vector<8x1xf32>
    %17 = vector.broadcast %16 : vector<8x1xf32> to vector<8x128xf32>
    %18 = arith.addf %14, %17 : vector<8x128xf32>
    %cst_15 = arith.constant 2.000000e-01 : f32
    %19 = vector.broadcast %cst_15 : f32 to vector<8x128xf32>
    %20 = arith.mulf %19, %18 : vector<8x128xf32>
    %21 = arith.maximumf %18, %20 : vector<8x128xf32>
    %c2 = arith.constant 2 : index
    %c0_16 = arith.constant 0 : index
    %c0_17 = arith.constant 0 : index
    %22 = vector.load %arg2[%c2, %c0_16, %c0_17] : memref<3x8x8xf32, #tpu.memory_space<vmem>>, vector<1x8x8xf32>
    %23 = vector.shape_cast %22 : vector<1x8x8xf32> to vector<8x8xf32>
    %cst_18 = arith.constant dense<0.000000e+00> : vector<8x128xf32>
    %24 = tpu.matmul %23, %21, %cst_18 {dimension_numbers = #tpu.dot_dimension_numbers<[1], [0], [0], [1], [0, 0, 1, 1], [], []>} : vector<8x8xf32>, vector<8x128xf32>, vector<8x128xf32> -> vector<8x128xf32>
    %c2_19 = arith.constant 2 : index
    %c0_20 = arith.constant 0 : index
    %c0_21 = arith.constant 0 : index
    %25 = vector.load %arg3[%c2_19, %c0_20, %c0_21] : memref<3x8x1xf32, #tpu.memory_space<vmem>>, vector<1x8x1xf32>
    %26 = vector.shape_cast %25 : vector<1x8x1xf32> to vector<8x1xf32>
    %27 = vector.broadcast %26 : vector<8x1xf32> to vector<8x128xf32>
    %28 = arith.addf %24, %27 : vector<8x128xf32>
    %cst_22 = arith.constant 2.000000e-01 : f32
    %29 = vector.broadcast %cst_22 : f32 to vector<8x128xf32>
    %30 = arith.mulf %29, %28 : vector<8x128xf32>
    %31 = arith.maximumf %28, %30 : vector<8x128xf32>
    %32 = tpu.iota {dimensions = array<i32: 1>} : vector<1x128xi32>
    %33 = vector.broadcast %0 : i32 to vector<1x128xi32>
    %34 = arith.cmpi slt, %32, %33 : vector<1x128xi32>
    %cst_23 = arith.constant 0xFF800000 : f32
    %35 = vector.shape_cast %34 : vector<1x128xi1> to vector<1x128xi1>
    %36 = vector.broadcast %35 : vector<1x128xi1> to vector<8x128xi1>
    %37 = vector.broadcast %cst_23 : f32 to vector<8x128xf32>
    %38 = arith.select %36, %31, %37 : vector<8x128xi1>, vector<8x128xf32>
    %cst_24 = arith.constant dense<0xFF800000> : vector<8xf32>
    %39 = vector.multi_reduction <maximumf>, %38, %cst_24 [1] : vector<8x128xf32> to vector<8xf32>
    %40 = vector.shape_cast %39 : vector<8xf32> to vector<8x1xf32>
    %cst_25 = arith.constant -3.000000e+38 : f32
    %41 = vector.broadcast %cst_25 : f32 to vector<8x1xf32>
    %42 = arith.maximumf %40, %41 : vector<8x1xf32>
    %43 = vector.broadcast %42 : vector<8x1xf32> to vector<8x128xf32>
    %44 = arith.subf %38, %43 : vector<8x128xf32>
    %45 = math.exp %44 : vector<8x128xf32>
    %cst_26 = arith.constant dense<0.000000e+00> : vector<8xf32>
    %46 = vector.multi_reduction <add>, %45, %cst_26 [1] : vector<8x128xf32> to vector<8xf32>
    %47 = vector.shape_cast %46 : vector<8xf32> to vector<8x1xf32>
    %cst_27 = arith.constant 1.000000e-30 : f32
    %48 = vector.broadcast %cst_27 : f32 to vector<8x1xf32>
    %49 = arith.maximumf %47, %48 : vector<8x1xf32>
    %50 = tpu.reciprocal %49 : vector<8x1xf32> -> vector<8x1xf32>
    %51 = vector.broadcast %50 : vector<8x1xf32> to vector<8x128xf32>
    %52 = arith.mulf %45, %51 : vector<8x128xf32>
    %c0_28 = arith.constant 0 : index
    %c0_29 = arith.constant 0 : index
    %53 = vector.load %arg4[%c0_28, %c0_29] : memref<8x128xf32, #tpu.memory_space<vmem>>, vector<8x128xf32>
    tpu.vector_store %arg4[%c0_28, %c0_29], %52 {strides = array<i32>} : memref<8x128xf32, #tpu.memory_space<vmem>>, vector<8x128xf32>,
    return
  }
}

</mosaic_0001>

<llo_original>
// kernel: neuralnet_forward.1
$region0: #{neuralnet_forward.1}
  #allocation0 [shape = 'u32[]', space=smem, size = 0x4, offset = 0x4, fixed_abs, tag = 'smem constant byte address 0x4 - core index']
  #allocation1 [shape = 'u32[144,128]{1,0:T(1,128)}', space=vmem, size = 0x12000, scoped, tag = 'internal scratch']
  #allocation2 [shape = 's32[1]{0:T(128)S(6)}', space=smem, size = 0x200, scoped, tag = 'scoped memory for neuralnet_forward.1']
  %s0 = inlined_call_operand.<no memory space> [shape: s32[1], index: 0, kind: input, shape index: {}]
  %s1 = inlined_call_operand.vmem [shape: f32[8,128], index: 1, kind: input, shape index: {}]
  %s2 = inlined_call_operand.vmem [shape: f32[3,8,8], index: 2, kind: input, shape index: {}]
  %s3 = inlined_call_operand.vmem [shape: f32[3,8,1], index: 3, kind: input, shape index: {}]
  %s4 = inlined_call_operand.vmem [shape: f32[8,128], index: 4, kind: output, shape index: {}]
  %s5 = sld [smem:[#allocation0]]
  $region26: #{neuralnet_forward.1} parent=0
    _
  %s7 = ssub.s32 1, %s5
  %s8 = scalar_select 0, %s7, %s5
  %9 = sst [smem:[#allocation2]] %s0
  // Predicated region
  $region2: #{neuralnet_forward.1} parent=0 // pred_check
    _
  $region3: #{neuralnet_forward.1} parent=0 // pred_check_branch
    %11 = sbr.rel (0) target = $region5
  $region4: #{neuralnet_forward.1} parent=0 // pred_region
    _
  $region5: #{neuralnet_forward.1} parent=0 // pred_fallthru
    _
  // Predicated region
  $region6: #{neuralnet_forward.1} parent=0 // pred_check
    _
  $region7: #{neuralnet_forward.1} parent=0 // pred_check_branch
    %13 = sbr.rel (0) target = $region9
  $region8: #{neuralnet_forward.1} parent=0 // pred_region
    _
  $region9: #{neuralnet_forward.1} parent=0 // pred_fallthru
    _
  // Predicated region
  $region10: #{neuralnet_forward.1} parent=0 // pred_check
    _
  $region11: #{neuralnet_forward.1} parent=0 // pred_check_branch
    %15 = sbr.rel (0) target = $region13
  $region12: #{neuralnet_forward.1} parent=0 // pred_region
    _
  $region13: #{neuralnet_forward.1} parent=0 // pred_fallthru
    _
  // Predicated region
  $region14: #{neuralnet_forward.1} parent=0 // pred_check
    _
  $region15: #{neuralnet_forward.1} parent=0 // pred_check_branch
    %17 = sbr.rel (0) target = $region17
  $region16: #{neuralnet_forward.1} parent=0 // pred_region
    _
  $region17: #{neuralnet_forward.1} parent=0 // pred_fallthru
    _
  %s18 = sld [smem:[#allocation2]]
  %v19 = vld [vmem:[%s1] sm:$0xff]
  %v20 = vld [vmem:[%s2] sm:$0xff]
  %v21 = vld [vmem:[%s3] sm:$0xff]
  %23 = vset.pattern.permute.xlu0 0
  %24 = vperm.xlu0 %23, %v21
  %v25 = vpop.permute.xlu0 %24
  %vm27 = vcmask 64512
  %v29 = vsel %vm27, %v20, 0
  %31 = vmatprep.subr.mxu0 0.0
  %32 = vmatpush1.msra.mxu0 %v19
  %33 = vmatprep.subr.mxu0 0.0
  %34 = vmatpush1.msra.mxu0 0.0
  %35 = vmatprep.subr.mxu0 0.0
  %36 = vmatpush1.msra.mxu0 0.0
  %37 = vmatprep.subr.mxu0 0.0
  %38 = vmatpush1.msra.mxu0 0.0
  %39 = vmatprep.subr.mxu0 0.0
  %40 = vmatpush1.msra.mxu0 0.0
  %41 = vmatprep.subr.mxu0 0.0
  %42 = vmatpush1.msra.mxu0 0.0
  %43 = vmatprep.subr.mxu0 0.0
  %44 = vmatpush1.msra.mxu0 0.0
  %45 = vmatprep.subr.mxu0 0.0
  %46 = vmatpush1.msra.mxu0 0.0
  %47 = vmatprep.subr.mxu0 0.0
  %48 = vmatpush1.msra.mxu0 0.0
  %49 = vmatprep.subr.mxu0 0.0
  %50 = vmatpush1.msra.mxu0 0.0
  %51 = vmatprep.subr.mxu0 0.0
  %52 = vmatpush1.msra.mxu0 0.0
  %53 = vmatprep.subr.mxu0 0.0
  %54 = vmatpush1.msra.mxu0 0.0
  %55 = vmatprep.subr.mxu0 0.0
  %56 = vmatpush1.msra.mxu0 0.0
  %57 = vmatprep.subr.mxu0 0.0
  %58 = vmatpush1.msra.mxu0 0.0
  %59 = vmatprep.subr.mxu0 0.0
  %60 = vmatpush1.msra.mxu0 0.0
  %61 = vmatprep.subr.mxu0 0.0
  %62 = vmatpush1.msra.mxu0 0.0
  %63 = vmatprep.subr.mxu0 0.0
  %64 = vmatpush1.msra.mxu0 0.0
  %65 = vmatprep.subr.mxu0 0.0
  %66 = vmatpush1.msra.mxu0 0.0
  %67 = vmatprep.subr.mxu0 0.0
  %68 = vmatpush1.msra.mxu0 0.0
  %69 = vmatprep.subr.mxu0 0.0
  %70 = vmatpush1.msra.mxu0 0.0
  %71 = vmatprep.subr.mxu0 0.0
  %72 = vmatpush1.msra.mxu0 0.0
  %73 = vmatprep.subr.mxu0 0.0
  %74 = vmatpush1.msra.mxu0 0.0
  %75 = vmatprep.subr.mxu0 0.0
  %76 = vmatpush1.msra.mxu0 0.0
  %77 = vmatprep.subr.mxu0 0.0
  %78 = vmatpush1.msra.mxu0 0.0
  %79 = vmatprep.subr.mxu0 0.0
  %80 = vmatpush1.msra.mxu0 0.0
  %81 = vmatprep.subr.mxu0 0.0
  %82 = vmatpush1.msra.mxu0 0.0
  %83 = vmatprep.subr.mxu0 0.0
  %84 = vmatpush1.msra.mxu0 0.0
  %85 = vmatprep.subr.mxu0 0.0
  %86 = vmatpush1.msra.mxu0 0.0
  %87 = vmatprep.subr.mxu0 0.0
  %88 = vmatpush1.msra.mxu0 0.0
  %89 = vmatprep.subr.mxu0 0.0
  %90 = vmatpush1.msra.mxu0 0.0
  %91 = vmatprep.subr.mxu0 0.0
  %92 = vmatpush1.msra.mxu0 0.0
  %93 = vmatprep.subr.mxu0 0.0
  %94 = vmatpush1.msra.mxu0 0.0
  %95 = vmatprep.mubr.f32.mxu0 0.0
  %96 = vmatmul.mubr.f32.gmra.mrb[0].mxu0 %v29
  %v97 = vpop.f32.mrb[0].mxu0
  %v98 = vadd.f32 %v25, %v97
  %v99 = vpop.f32.mrb[0].mxu0
  %100 = vdwg.mxu0
  %v101 = vmul.f32 %v98, 0.2
  %v102 = vmax.f32 %v98, %v101
  %s103 = scalar_lea.vmem %s2, 8
  %v104 = vld [vmem:[%s103] sm:$0xff]
  %s105 = scalar_lea.vmem %s3, 8
  %v106 = vld [vmem:[%s105] sm:$0xff]
  %108 = vset.pattern.permute.xlu0 0
  %109 = vperm.xlu0 %108, %v106
  %v110 = vpop.permute.xlu0 %109
  %v113 = vsel %vm27, %v104, 0
  %115 = vmatprep.subr.mxu0 0.0
  %116 = vmatpush1.msra.mxu0 %v102
  %117 = vmatprep.subr.mxu0 0.0
  %118 = vmatpush1.msra.mxu0 0.0
  %119 = vmatprep.subr.mxu0 0.0
  %120 = vmatpush1.msra.mxu0 0.0
  %121 = vmatprep.subr.mxu0 0.0
  %122 = vmatpush1.msra.mxu0 0.0
  %123 = vmatprep.subr.mxu0 0.0
  %124 = vmatpush1.msra.mxu0 0.0
  %125 = vmatprep.subr.mxu0 0.0
  %126 = vmatpush1.msra.mxu0 0.0
  %127 = vmatprep.subr.mxu0 0.0
  %128 = vmatpush1.msra.mxu0 0.0
  %129 = vmatprep.subr.mxu0 0.0
  %130 = vmatpush1.msra.mxu0 0.0
  %131 = vmatprep.subr.mxu0 0.0
  %132 = vmatpush1.msra.mxu0 0.0
  %133 = vmatprep.subr.mxu0 0.0
  %134 = vmatpush1.msra.mxu0 0.0
  %135 = vmatprep.subr.mxu0 0.0
  %136 = vmatpush1.msra.mxu0 0.0
  %137 = vmatprep.subr.mxu0 0.0
  %138 = vmatpush1.msra.mxu0 0.0
  %139 = vmatprep.subr.mxu0 0.0
  %140 = vmatpush1.msra.mxu0 0.0
  %141 = vmatprep.subr.mxu0 0.0
  %142 = vmatpush1.msra.mxu0 0.0
  %143 = vmatprep.subr.mxu0 0.0
  %144 = vmatpush1.msra.mxu0 0.0
  %145 = vmatprep.subr.mxu0 0.0
  %146 = vmatpush1.msra.mxu0 0.0
  %147 = vmatprep.subr.mxu0 0.0
  %148 = vmatpush1.msra.mxu0 0.0
  %149 = vmatprep.subr.mxu0 0.0
  %150 = vmatpush1.msra.mxu0 0.0
  %151 = vmatprep.subr.mxu0 0.0
  %152 = vmatpush1.msra.mxu0 0.0
  %153 = vmatprep.subr.mxu0 0.0
  %154 = vmatpush1.msra.mxu0 0.0
  %155 = vmatprep.subr.mxu0 0.0
  %156 = vmatpush1.msra.mxu0 0.0
  %157 = vmatprep.subr.mxu0 0.0
  %158 = vmatpush1.msra.mxu0 0.0
  %159 = vmatprep.subr.mxu0 0.0
  %160 = vmatpush1.msra.mxu0 0.0
  %161 = vmatprep.subr.mxu0 0.0
  %162 = vmatpush1.msra.mxu0 0.0
  %163 = vmatprep.subr.mxu0 0.0
  %164 = vmatpush1.msra.mxu0 0.0
  %165 = vmatprep.subr.mxu0 0.0
  %166 = vmatpush1.msra.mxu0 0.0
  %167 = vmatprep.subr.mxu0 0.0
  %168 = vmatpush1.msra.mxu0 0.0
  %169 = vmatprep.subr.mxu0 0.0
  %170 = vmatpush1.msra.mxu0 0.0
  %171 = vmatprep.subr.mxu0 0.0
  %172 = vmatpush1.msra.mxu0 0.0
  %173 = vmatprep.subr.mxu0 0.0
  %174 = vmatpush1.msra.mxu0 0.0
  %175 = vmatprep.subr.mxu0 0.0
  %176 = vmatpush1.msra.mxu0 0.0
  %177 = vmatprep.subr.mxu0 0.0
  %178 = vmatpush1.msra.mxu0 0.0
  %179 = vmatprep.mubr.f32.mxu0 0.0
  %180 = vmatmul.mubr.f32.gmra.mrb[0].mxu0 %v113
  %v181 = vpop.f32.mrb[0].mxu0
  %v182 = vadd.f32 %v110, %v181
  %v183 = vpop.f32.mrb[0].mxu0
  %184 = vdwg.mxu0
  %v185 = vmul.f32 %v182, 0.2
  %v186 = vmax.f32 %v182, %v185
  %s187 = scalar_lea.vmem %s2, 16
  %v188 = vld [vmem:[%s187] sm:$0xff]
  %s189 = scalar_lea.vmem %s3, 16
  %v190 = vld [vmem:[%s189] sm:$0xff]
  %192 = vset.pattern.permute.xlu0 0
  %193 = vperm.xlu0 %192, %v190
  %v194 = vpop.permute.xlu0 %193
  %v197 = vsel %vm27, %v188, 0
  %199 = vmatprep.subr.mxu0 0.0
  %200 = vmatpush1.msra.mxu0 %v186
  %201 = vmatprep.subr.mxu0 0.0
  %202 = vmatpush1.msra.mxu0 0.0
  %203 = vmatprep.subr.mxu0 0.0
  %204 = vmatpush1.msra.mxu0 0.0
  %205 = vmatprep.subr.mxu0 0.0
  %206 = vmatpush1.msra.mxu0 0.0
  %207 = vmatprep.subr.mxu0 0.0
  %208 = vmatpush1.msra.mxu0 0.0
  %209 = vmatprep.subr.mxu0 0.0
  %210 = vmatpush1.msra.mxu0 0.0
  %211 = vmatprep.subr.mxu0 0.0
  %212 = vmatpush1.msra.mxu0 0.0
  %213 = vmatprep.subr.mxu0 0.0
  %214 = vmatpush1.msra.mxu0 0.0
  %215 = vmatprep.subr.mxu0 0.0
  %216 = vmatpush1.msra.mxu0 0.0
  %217 = vmatprep.subr.mxu0 0.0
  %218 = vmatpush1.msra.mxu0 0.0
  %219 = vmatprep.subr.mxu0 0.0
  %220 = vmatpush1.msra.mxu0 0.0
  %221 = vmatprep.subr.mxu0 0.0
  %222 = vmatpush1.msra.mxu0 0.0
  %223 = vmatprep.subr.mxu0 0.0
  %224 = vmatpush1.msra.mxu0 0.0
  %225 = vmatprep.subr.mxu0 0.0
  %226 = vmatpush1.msra.mxu0 0.0
  %227 = vmatprep.subr.mxu0 0.0
  %228 = vmatpush1.msra.mxu0 0.0
  %229 = vmatprep.subr.mxu0 0.0
  %230 = vmatpush1.msra.mxu0 0.0
  %231 = vmatprep.subr.mxu0 0.0
  %232 = vmatpush1.msra.mxu0 0.0
  %233 = vmatprep.subr.mxu0 0.0
  %234 = vmatpush1.msra.mxu0 0.0
  %235 = vmatprep.subr.mxu0 0.0
  %236 = vmatpush1.msra.mxu0 0.0
  %237 = vmatprep.subr.mxu0 0.0
  %238 = vmatpush1.msra.mxu0 0.0
  %239 = vmatprep.subr.mxu0 0.0
  %240 = vmatpush1.msra.mxu0 0.0
  %241 = vmatprep.subr.mxu0 0.0
  %242 = vmatpush1.msra.mxu0 0.0
  %243 = vmatprep.subr.mxu0 0.0
  %244 = vmatpush1.msra.mxu0 0.0
  %245 = vmatprep.subr.mxu0 0.0
  %246 = vmatpush1.msra.mxu0 0.0
  %247 = vmatprep.subr.mxu0 0.0
  %248 = vmatpush1.msra.mxu0 0.0
  %249 = vmatprep.subr.mxu0 0.0
  %250 = vmatpush1.msra.mxu0 0.0
  %251 = vmatprep.subr.mxu0 0.0
  %252 = vmatpush1.msra.mxu0 0.0
  %253 = vmatprep.subr.mxu0 0.0
  %254 = vmatpush1.msra.mxu0 0.0
  %255 = vmatprep.subr.mxu0 0.0
  %256 = vmatpush1.msra.mxu0 0.0
  %257 = vmatprep.subr.mxu0 0.0
  %258 = vmatpush1.msra.mxu0 0.0
  %259 = vmatprep.subr.mxu0 0.0
  %260 = vmatpush1.msra.mxu0 0.0
  %261 = vmatprep.subr.mxu0 0.0
  %262 = vmatpush1.msra.mxu0 0.0
  %263 = vmatprep.mubr.f32.mxu0 0.0
  %264 = vmatmul.mubr.f32.gmra.mrb[0].mxu0 %v197
  %v265 = vpop.f32.mrb[0].mxu0
  %v266 = vadd.f32 %v194, %v265
  %v267 = vpop.f32.mrb[0].mxu0
  %268 = vdwg.mxu0
  %v269 = vmul.f32 %v266, 0.2
  %v270 = vmax.f32 %v266, %v269
  %v271 = vlaneseq
  %v272 = vand.u32 %v271, 127
  %v273 = vstv %s18
  %vm274 = vcmp.lt.s32.totalorder %v272, %v273
  %v275 = vsel %vm274, 1, 0
  %vm276 = vcmp.eq.s32.totalorder %v275, 1
  %v277 = vsel %vm276, %v270, -inf
  %278 = vmax.xlane.f32.xlu0 %v277
  %v279 = vpop.xlane.xlu0 %278
  %v280 = vmax.f32 %v279, -3e+38
  %v281 = vsub.f32 %v277, %v280
  %v282 = vmul.f32 %v281, 1.442695
  %v283 = vpow.pop %v282
  %284 = vadd.xlane.f32.xlu0 %v283
  %v285 = vpop.xlane.xlu0 %284
  %v286 = vmax.f32 %v285, 1e-30
  %v287 = vrcp.pop %v286
  %v288 = vmul.f32 %v283, %v287
  %289 = vst [vmem:[%s4] sm:$0xff] %v288
  // Predicated region
  $region18: #{neuralnet_forward.1} parent=0 // pred_check
    _
  $region19: #{neuralnet_forward.1} parent=0 // pred_check_branch
    %291 = sbr.rel (0) target = $region21
  $region20: #{neuralnet_forward.1} parent=0 // pred_region
    _
  $region21: #{neuralnet_forward.1} parent=0 // pred_fallthru
    _
  // Predicated region
  $region22: #{neuralnet_forward.1} parent=0 // pred_check
    _
  $region23: #{neuralnet_forward.1} parent=0 // pred_check_branch
    %293 = sbr.rel (0) target = $region25
  $region24: #{neuralnet_forward.1} parent=0 // pred_region
    _
  $region25: #{neuralnet_forward.1} parent=0 // pred_fallthru
    _

</llo_original>
